<compile_context>
chip_gen: v5e
topology: v5e:2x2
jax: 0.10.0
libtpu: 0.0.40
codegen_flags: <defaults>
</compile_context>

<pallas_src>
import jax
import jax.numpy as jnp
import numpy as np
from jax.experimental import pallas as pl
from jax.experimental.pallas import tpu as pltpu

# DiffJPEG / libjpeg chrominance quantization table (note the .T, matching utils.c_table)
_C_TABLE = np.full((8, 8), 99, dtype=np.float32)
_C_TABLE[:4, :4] = np.array(
    [[17, 18, 24, 47],
     [18, 21, 26, 66],
     [24, 26, 56, 99],
     [47, 66, 99, 99]], dtype=np.float32).T

_TARGET_BLOCK_BYTES = 4 * 1024 * 1024   # ~4 MiB per image block (double-buffered -> ~16 MiB)


def _dequant_kernel(img_ref, tab_ref, out_ref):
    # img_ref: (tile_rows, L) slab of flattened 8x8 DCT blocks
    # tab_ref: (8, L) quantization coefficients (factor folded in); all 8 rows identical
    img = img_ref[...]
    tab = tab_ref[...]
    r, l = img.shape
    if r % 8 == 0:
        # vreg-native: view rows as (r//8, 8) sublane strips and broadcast the (8, L)
        # table over the strip axis -- no per-strip sublane broadcast needed.
        out = (img.reshape(r // 8, 8, l) * tab).reshape(r, l)
    else:
        # tiny-input fallback (rows not a multiple of 8): plain row broadcast
        out = img * tab[:1]
    out_ref[...] = out


def c_dequantize(image, factor=1.0, in_place=False):
    """image: (..., 8, 8) float -> image * (c_table * factor), same shape/dtype.

    Set in_place=True only when the caller donates `image`; it aliases input and
    output buffers (avoids a fresh allocation) but forces a defensive copy otherwise.
    """
    orig_shape = image.shape
    assert orig_shape[-2:] == (8, 8), "trailing dims must be the 8x8 DCT block"
    dtype = image.dtype
    total = int(np.prod(orig_shape))

    # Lane width: largest of {512, 256, 128, 64} that divides the element count exactly
    # (total is always a multiple of 64), so no pad / no output slice is ever needed.
    for lanes in (512, 256, 128, 64):
        if total % lanes == 0:
            break
    rows = total // lanes

    # Dtype-aware tile sizing: ~4 MiB blocks, rows a multiple of 8 (sublane tiling).
    itemsize = jnp.dtype(dtype).itemsize
    tile_rows = max(8, (_TARGET_BLOCK_BYTES // (lanes * itemsize)) // 8 * 8)
    if rows <= tile_rows:
        tile_rows = rows               # single full-extent block (exact)
        grid = (1,)
    else:
        grid = (pl.cdiv(rows, tile_rows),)   # ragged last block handled by Pallas

    # Quant coefficients repeat with period 64 along the flattened array; lanes % 64 == 0,
    # so one (8, lanes) slab (identical rows) covers every element of the 2-D view.
    base = np.asarray(_C_TABLE, dtype=np.float32).reshape(-1)
    if isinstance(factor, (int, float, np.integer, np.floating)):
        row = np.tile(base * np.float32(factor), lanes // 64)
        table = jnp.asarray(
            np.ascontiguousarray(np.broadcast_to(row, (8, lanes))), dtype=dtype)
    else:
        # factor is a traced value: build the table on device.
        row = jnp.tile(jnp.asarray(base) * jnp.asarray(factor).astype(jnp.float32),
                       lanes // 64)
        table = jnp.broadcast_to(row, (8, lanes)).astype(dtype)

    extra = {}
    if in_place:
        extra["input_output_aliases"] = {0: 0}

    out2d = pl.pallas_call(
        _dequant_kernel,
        out_shape=jax.ShapeDtypeStruct((rows, lanes), dtype),
        grid_spec=pltpu.PrefetchScalarGridSpec(
            num_scalar_prefetch=0,
            grid=grid,
            in_specs=[
                pl.BlockSpec((tile_rows, lanes), lambda i: (i, 0)),
                pl.BlockSpec((8, lanes), lambda i: (0, 0)),   # DMA'd once
            ],
            out_specs=pl.BlockSpec((tile_rows, lanes), lambda i: (i, 0)),
        ),
        compiler_params=pltpu.CompilerParams(
            dimension_semantics=("parallel",),          # megacore split on v7x
            vmem_limit_bytes=32 * 1024 * 1024),          # headroom for 4 MiB blocks on v5e
        **extra,
    )(image.reshape(rows, lanes), table)

    return out2d.reshape(orig_shape)


if __name__ == "__main__":
    key = jax.random.PRNGKey(0)
    B, N = 2, 64                       # 2 images, 64 8x8 chroma blocks each
    image = jax.random.normal(key, (B, N, 8, 8), dtype=jnp.float32) * 10.0
    factor = 2.0

    out = jax.block_until_ready(c_dequantize(image, factor))

    # reference check (plain JAX, mirrors the PyTorch forward exactly)
    ref = image * (jnp.asarray(_C_TABLE) * jnp.float32(factor))
    np.testing.assert_allclose(np.asarray(out), np.asarray(ref), rtol=1e-6, atol=1e-6)

    print("KERNEL_OK")
</pallas_src>

<mosaic_0001>
module attributes {stable_mosaic.version = 11 : i64} {
  func.func @_dequant_kernel(%arg0: i32, %arg1: memref<16x512xf32, #tpu.memory_space<vmem>>, %arg2: memref<8x512xf32, #tpu.memory_space<vmem>>, %arg3: memref<16x512xf32, #tpu.memory_space<vmem>>) attributes {dimension_semantics = [#tpu.dimension_semantics<parallel>], iteration_bounds = array<i64: 1>, scalar_prefetch = 0 : i64, scratch_operands = 0 : i64, tpu.core_type = #tpu.core_type<tc>, window_params = [{transform_indices = @transform_0, window_bounds = array<i64: 16, 512>}, {pipeline_mode = #tpu.pipeline_mode<synchronous>, transform_indices = @transform_1, window_bounds = array<i64: 8, 512>}, {transform_indices = @transform_2, window_bounds = array<i64: 16, 512>}]} {
    %c0 = arith.constant 0 : index
    %c0_0 = arith.constant 0 : index
    %0 = vector.load %arg1[%c0, %c0_0] : memref<16x512xf32, #tpu.memory_space<vmem>>, vector<16x512xf32>
    %c0_1 = arith.constant 0 : index
    %c0_2 = arith.constant 0 : index
    %1 = vector.load %arg2[%c0_1, %c0_2] : memref<8x512xf32, #tpu.memory_space<vmem>>, vector<8x512xf32>
    %2 = vector.shape_cast %0 : vector<16x512xf32> to vector<2x8x512xf32>
    %3 = vector.shape_cast %1 : vector<8x512xf32> to vector<1x8x512xf32>
    %4 = vector.broadcast %3 : vector<1x8x512xf32> to vector<2x8x512xf32>
    %5 = arith.mulf %2, %4 : vector<2x8x512xf32>
    %6 = vector.shape_cast %5 : vector<2x8x512xf32> to vector<16x512xf32>
    %c0_3 = arith.constant 0 : index
    %c0_4 = arith.constant 0 : index
    %7 = vector.load %arg3[%c0_3, %c0_4] : memref<16x512xf32, #tpu.memory_space<vmem>>, vector<16x512xf32>
    tpu.vector_store %arg3[%c0_3, %c0_4], %6 {strides = array<i32>} : memref<16x512xf32, #tpu.memory_space<vmem>>, vector<16x512xf32>,
    return
  }
  func.func @transform_0(%arg0: i32) -> (i32, i32) {
    %c0_i32 = arith.constant 0 : i32
    %c0_i32_0 = arith.constant 0 : i32
    return %arg0, %c0_i32 : i32, i32
  }
  func.func @transform_1(%arg0: i32) -> (i32, i32) {
    %c0_i32 = arith.constant 0 : i32
    %c0_i32_0 = arith.constant 0 : i32
    %c0_i32_1 = arith.constant 0 : i32
    return %c0_i32, %c0_i32_0 : i32, i32
  }
  func.func @transform_2(%arg0: i32) -> (i32, i32) {
    %c0_i32 = arith.constant 0 : i32
    %c0_i32_0 = arith.constant 0 : i32
    return %arg0, %c0_i32 : i32, i32
  }
}

</mosaic_0001>

<llo_original>
// kernel: tpu_custom_call.1
$region0: #{tpu_custom_call.1}
  #allocation0 [shape = 'u32[]', space=smem, size = 0x4, offset = 0x4, fixed_abs, tag = 'smem constant byte address 0x4 - core index']
  #allocation1 [shape = 'u32[72,128]{1,0:T(1,128)}', space=vmem, size = 0x9000, scoped, tag = 'internal scratch']
  %s0 = inlined_call_operand.hbm [shape: f32[16,512], index: 0, kind: input, shape index: {}]
  %s1 = inlined_call_operand.hbm [shape: f32[8,512], index: 1, kind: input, shape index: {}]
  %s2 = inlined_call_operand.hbm [shape: f32[16,512], index: 2, kind: output, shape index: {}]
  %s3 = sld [smem:[#allocation0]]
  $region26: #{tpu_custom_call.1} parent=0
    _
  %s5 = ssub.s32 1, %s3
  %s6 = scalar_select 0, %s5, %s3
  $region1: #{tpu_custom_call.1} parent=0
    #allocation2 [shape = 'u8[32768]{0}', space=vmem, size = 0x8000, scoped, tag = 'input window, operand 0, single buffered']
    #allocation3 [shape = 's32[1]{0}', space=sflag, size = 0x4, scoped, tag = 'scoped memory for tpu_custom_call.1']
    #allocation4 [shape = 's32[1]{0}', space=sflag, size = 0x4, scoped, tag = 'scoped memory for tpu_custom_call.1']
    #allocation5 [shape = 'u8[16384]{0}', space=vmem, size = 0x4000, scoped, tag = 'input window, operand 1, single buffered']
    #allocation6 [shape = 's32[1]{0}', space=sflag, size = 0x4, scoped, tag = 'scoped memory for tpu_custom_call.1']
    #allocation7 [shape = 'u8[32768]{0}', space=vmem, size = 0x8000, scoped, tag = 'output window, operand 0, single buffered']
    %7 = vsyncpa [#allocation3], 0
    %8 = vsyncpa [#allocation6], 0
    %9 = vsyncpa [#allocation4], 0
    // Predicated region
    $region2: #{tpu_custom_call.1} parent=1 // pred_check
      _
    $region3: #{tpu_custom_call.1} parent=1 // pred_check_branch
      %11 = sbr.rel (0) target = $region5
    $region4: #{tpu_custom_call.1} parent=1 // pred_region
      %13 = vsyncadd [#allocation3], 0
      %s14 = sshll.u32 %s0, 4
      %s15 = int_to_ptr.hbm [resolvable:$true] %s14
      %s16 = sshll.u32 [#allocation2], 4
      %s17 = int_to_ptr.vmem [resolvable:$true] %s16
      %22 = dma.hbm_to_vmem [thread:$0]  %s15, 1024, %s17, [#allocation3], 512, 512, 32
    $region5: #{tpu_custom_call.1} parent=1 // pred_fallthru
      _
    // Predicated region
    $region6: #{tpu_custom_call.1} parent=1 // pred_check
      _
    $region7: #{tpu_custom_call.1} parent=1 // pred_check_branch
      %24 = sbr.rel (0) target = $region9
    $region8: #{tpu_custom_call.1} parent=1 // pred_region
      %26 = vsyncadd [#allocation6], 0
      %s28 = sshll.u32 %s1, 4
      %s29 = int_to_ptr.hbm [resolvable:$true] %s28
      %s30 = sshll.u32 [#allocation5], 4
      %s31 = int_to_ptr.vmem [resolvable:$true] %s30
      %33 = dma.hbm_to_vmem [thread:$0]  %s29, 512, %s31, [#allocation6]
    $region9: #{tpu_custom_call.1} parent=1 // pred_fallthru
      _
    // Predicated region
    $region10: #{tpu_custom_call.1} parent=1 // pred_check
      _
    $region11: #{tpu_custom_call.1} parent=1 // pred_check_branch
      %35 = sbr.rel (0) target = $region13
    $region12: #{tpu_custom_call.1} parent=1 // pred_region
      %37 = dma.done [#allocation3], 1024
    $region13: #{tpu_custom_call.1} parent=1 // pred_fallthru
      _
    // Predicated region
    $region14: #{tpu_custom_call.1} parent=1 // pred_check
      _
    $region15: #{tpu_custom_call.1} parent=1 // pred_check_branch
      %39 = sbr.rel (0) target = $region17
    $region16: #{tpu_custom_call.1} parent=1 // pred_region
      %41 = dma.done [#allocation6], 512
    $region17: #{tpu_custom_call.1} parent=1 // pred_fallthru
      _
    %v42 = vld [vmem:[#allocation2] sm:$0xff]
    %v43 = vld [vmem:[#allocation2 + $0x8] sm:$0xff]
    %v44 = vld [vmem:[#allocation2 + $0x10] sm:$0xff]
    %v45 = vld [vmem:[#allocation2 + $0x18] sm:$0xff]
    %v46 = vld [vmem:[#allocation2 + $0x20] sm:$0xff]
    %v47 = vld [vmem:[#allocation2 + $0x28] sm:$0xff]
    %v48 = vld [vmem:[#allocation2 + $0x30] sm:$0xff]
    %v49 = vld [vmem:[#allocation2 + $0x38] sm:$0xff]
    %v50 = vld [vmem:[#allocation5] sm:$0xff]
    %v51 = vld [vmem:[#allocation5 + $0x8] sm:$0xff]
    %v52 = vld [vmem:[#allocation5 + $0x10] sm:$0xff]
    %v53 = vld [vmem:[#allocation5 + $0x18] sm:$0xff]
    %v54 = vmul.f32 %v42, %v50
    %v55 = vmul.f32 %v43, %v51
    %v56 = vmul.f32 %v44, %v52
    %v57 = vmul.f32 %v45, %v53
    %v58 = vmul.f32 %v46, %v50
    %v59 = vmul.f32 %v47, %v51
    %v60 = vmul.f32 %v48, %v52
    %v61 = vmul.f32 %v49, %v53
    %62 = vst [vmem:[#allocation7] sm:$0xff] %v54
    %63 = vst [vmem:[#allocation7 + $0x8] sm:$0xff] %v55
    %64 = vst [vmem:[#allocation7 + $0x10] sm:$0xff] %v56
    %65 = vst [vmem:[#allocation7 + $0x18] sm:$0xff] %v57
    %66 = vst [vmem:[#allocation7 + $0x20] sm:$0xff] %v58
    %67 = vst [vmem:[#allocation7 + $0x28] sm:$0xff] %v59
    %68 = vst [vmem:[#allocation7 + $0x30] sm:$0xff] %v60
    %69 = vst [vmem:[#allocation7 + $0x38] sm:$0xff] %v61
    // Predicated region
    $region18: #{tpu_custom_call.1} parent=1 // pred_check
      _
    $region19: #{tpu_custom_call.1} parent=1 // pred_check_branch
      %71 = sbr.rel (0) target = $region21
    $region20: #{tpu_custom_call.1} parent=1 // pred_region
      %73 = vsyncadd [#allocation4], 0
      %s74 = sshll.u32 [#allocation7], 4
      %s75 = int_to_ptr.vmem [resolvable:$true] %s74
      %s76 = sshll.u32 %s2, 4
      %s77 = int_to_ptr.hbm [resolvable:$true] %s76
      %82 = dma.vmem_to_hbm [thread:$0]  %s75, 1024, %s77, [#allocation4], 512, 512, 32
    $region21: #{tpu_custom_call.1} parent=1 // pred_fallthru
      _
    // Predicated region
    $region22: #{tpu_custom_call.1} parent=1 // pred_check
      _
    $region23: #{tpu_custom_call.1} parent=1 // pred_check_branch
      %84 = sbr.rel (0) target = $region25
    $region24: #{tpu_custom_call.1} parent=1 // pred_region
      %86 = dma.done [#allocation4], 1024
    $region25: #{tpu_custom_call.1} parent=1 // pred_fallthru
      _
    %87 = vsyncpa [#allocation3], 1
    %88 = vsyncpa [#allocation6], 1
    %89 = vsyncpa [#allocation4], 1

</llo_original>
